<compile_context>
chip_gen: v7x
topology: tpu7x:2x2x1
jax: 0.10.0
libtpu: 0.0.40
codegen_flags: <defaults>
</compile_context>

<pallas_src>
import functools

import jax
import jax.numpy as jnp
from jax.experimental import pallas as pl
from jax.experimental.pallas import tpu as pltpu


def _round_up(x, m):
    return (x + m - 1) // m * m


# ----------------------------------------------------------------------------
# Fused Pallas kernel: for one row-block m, accumulate over K tiles
#   acc0 += A0[m,k] @ feat[k]      acc1 += A1[m,k] @ feat[k]
# where feat = x@W (assoc_xw_first) or feat = x (W applied in the finalize),
# and on the last K step write out[m] = [acc0(+W)+b | acc1(+W)+b].
# ----------------------------------------------------------------------------
def _agcn_fused_kernel(*refs, f_out, tile, assoc_xw_first, feat_resident):
    if assoc_xw_first:
        a0_ref, a1_ref, feat_ref, b_ref, o_ref, acc0_ref, acc1_ref = refs
        w_ref = None
    else:
        a0_ref, a1_ref, feat_ref, w_ref, b_ref, o_ref, acc0_ref, acc1_ref = refs

    k = pl.program_id(1)

    @pl.when(k == 0)
    def _init():
        acc0_ref[...] = jnp.zeros_like(acc0_ref)
        acc1_ref[...] = jnp.zeros_like(acc1_ref)

    if feat_resident:
        # Whole feature matrix stays VMEM-resident (constant-index BlockSpec);
        # slice the K tile in-kernel.
        off = pl.multiple_of(k * tile, 128)
        feat = feat_ref[pl.ds(off, tile), :]
    else:
        feat = feat_ref[...]

    acc0_ref[...] += jnp.dot(a0_ref[...], feat, preferred_element_type=jnp.float32)
    acc1_ref[...] += jnp.dot(a1_ref[...], feat, preferred_element_type=jnp.float32)

    @pl.when(k == pl.num_programs(1) - 1)
    def _finalize():
        # Bias add (and optional trailing @W) hoisted out of the K loop.
        bias = b_ref[...].astype(jnp.float32)
        if assoc_xw_first:
            y0 = acc0_ref[...] + bias
            y1 = acc1_ref[...] + bias
        else:
            wmat = w_ref[...]
            y0 = jnp.dot(acc0_ref[...].astype(wmat.dtype), wmat,
                         preferred_element_type=jnp.float32) + bias
            y1 = jnp.dot(acc1_ref[...].astype(wmat.dtype), wmat,
                         preferred_element_type=jnp.float32) + bias
        if f_out % 128 == 0:
            # Lane-aligned halves -> two unmasked full-width slice stores.
            o_ref[:, :f_out] = y0.astype(o_ref.dtype)
            o_ref[:, f_out:] = y1.astype(o_ref.dtype)
        else:
            # Small-F_out fallback: one-hot lane placement so the store is a
            # single full-block write (masks are tiny when f_out < 128).
            r = jax.lax.broadcasted_iota(jnp.int32, (f_out, 2 * f_out), 0)
            c = jax.lax.broadcasted_iota(jnp.int32, (f_out, 2 * f_out), 1)
            p0 = (c == r).astype(jnp.float32)            # [I | 0]
            p1 = (c == r + f_out).astype(jnp.float32)    # [0 | I]
            o_ref[...] = (jnp.dot(y0, p0, preferred_element_type=jnp.float32)
                          + jnp.dot(y1, p1, preferred_element_type=jnp.float32)
                          ).astype(o_ref.dtype)


# ----------------------------------------------------------------------------
# Glue: D^{-1/2}(A+I)D^{-1/2} built directly at padded size in operand dtype.
# ----------------------------------------------------------------------------
def normalized_adjacency(edge_index, num_nodes, n_pad=None, out_dtype=jnp.float32):
    """edge_index: int [2, E] (src row 0, dst row 1); messages flow src->dst.
    Matches PyG gcn_norm + add_remaining_self_loops for unweighted graphs:
    pre-existing self loops are replaced by a single weight-1 self loop,
    duplicate non-self-loop edges keep their multiplicity."""
    if n_pad is None:
        n_pad = num_nodes
    src = edge_index[0].astype(jnp.int32)
    dst = edge_index[1].astype(jnp.int32)
    ew = jnp.where(src != dst, 1.0, 0.0).astype(jnp.float32)
    adj = jnp.zeros((n_pad, n_pad), jnp.float32).at[dst, src].add(ew)
    adj = adj + jnp.eye(n_pad, dtype=jnp.float32)      # one self loop per node
    deg = jnp.sum(adj, axis=1)                         # deg >= 1 everywhere
    d_inv_sqrt = jax.lax.rsqrt(deg)
    # Cast fused into the final elementwise pass (no separate pad/cast pre-pass).
    return (adj * d_inv_sqrt[:, None] * d_inv_sqrt[None, :]).astype(out_dtype)


# ----------------------------------------------------------------------------
# aGCN_conv forward (use_A = -2, edge_attr = None branch):
#   out = concat(layer0(x, ei[0]), layer0(x, ei[1]), dim=1)
# ----------------------------------------------------------------------------
def agcn_conv_forward(x, edge_index_list, w, b, use_A=-2, *,
                      operand_dtype=jnp.bfloat16, tile=None, feat_resident=None):
    # TODO(synk): |use_A| != 2 and the edge_attr branch would need the fused
    # kernel generalized (stacked-adjacency grid axis / edge-weighted norm);
    # only the module's default use_A=-2, edge_attr=None path is implemented.
    assert use_A == -2 and len(edge_index_list) >= 2
    n, f_in = x.shape
    f_out = w.shape[1]

    # Tile selection: lane dim padded to >=128; 512 tiles at realistic N
    # (bf16 A: 2 adj x 2 bufs x 0.5 MiB, well inside v5e 16 MiB scoped and
    # v7x 64 MiB physical VMEM).
    if tile is None:
        tile = min(512, _round_up(n, 128))
    n_pad = _round_up(n, tile)

    a0 = normalized_adjacency(edge_index_list[0], n, n_pad, operand_dtype)
    a1 = normalized_adjacency(edge_index_list[1], n, n_pad, operand_dtype)

    xp = jnp.pad(x.astype(jnp.float32), ((0, n_pad - n), (0, 0)))
    assoc_xw_first = f_out <= f_in          # cheaper N^2 association
    if assoc_xw_first:
        # x @ W computed ONCE outside the grid (not per (m,k) step).
        feat = jnp.dot(xp, w.astype(jnp.float32),
                       preferred_element_type=jnp.float32).astype(operand_dtype)
    else:
        feat = xp.astype(operand_dtype)
    feat_width = feat.shape[1]

    dsize = jnp.dtype(operand_dtype).itemsize
    if feat_resident is None:
        # Keep the whole feature matrix VMEM-resident when it is small enough;
        # otherwise stream a (tile, width) block per K step.
        feat_resident = n_pad * feat_width * dsize <= (4 << 20)

    wp = w.astype(operand_dtype)
    bp = jnp.asarray(b, jnp.float32).reshape(1, f_out)

    grid = (n_pad // tile, n_pad // tile)   # (row blocks: parallel, K: reduction)
    kernel = functools.partial(_agcn_fused_kernel, f_out=f_out, tile=tile,
                               assoc_xw_first=assoc_xw_first,
                               feat_resident=feat_resident)

    if feat_resident:
        feat_spec = pl.BlockSpec((n_pad, feat_width), lambda m, k: (0, 0))
    else:
        feat_spec = pl.BlockSpec((tile, feat_width), lambda m, k: (k, 0))

    in_specs = [
        pl.BlockSpec((tile, tile), lambda m, k: (m, k)),    # A_hat0 tile
        pl.BlockSpec((tile, tile), lambda m, k: (m, k)),    # A_hat1 tile
        feat_spec,                                          # x@W (or x)
    ]
    operands = [a0, a1, feat]
    if not assoc_xw_first:
        in_specs.append(pl.BlockSpec((f_in, f_out), lambda m, k: (0, 0)))  # W
        operands.append(wp)
    in_specs.append(pl.BlockSpec((1, f_out), lambda m, k: (0, 0)))         # bias
    operands.append(bp)

    flops = 4 * n_pad * n_pad * feat_width
    if not assoc_xw_first:
        flops += 4 * n_pad * f_in * f_out
    feat_reads = 1 if feat_resident else (n_pad // tile)
    bytes_accessed = (2 * n_pad * n_pad * dsize
                      + feat_reads * n_pad * feat_width * dsize
                      + f_in * f_out * dsize + f_out * 4
                      + n_pad * 2 * f_out * 4)

    out = pl.pallas_call(
        kernel,
        out_shape=jax.ShapeDtypeStruct((n_pad, 2 * f_out), jnp.float32),
        grid=grid,
        in_specs=in_specs,
        out_specs=pl.BlockSpec((tile, 2 * f_out), lambda m, k: (m, 0)),
        scratch_shapes=[
            pltpu.VMEM((tile, feat_width), jnp.float32),
            pltpu.VMEM((tile, feat_width), jnp.float32),
        ],
        compiler_params=pltpu.CompilerParams(
            dimension_semantics=("parallel", "arbitrary"),
            vmem_limit_bytes=32 * 1024 * 1024,
        ),
        cost_estimate=pl.CostEstimate(flops=flops, transcendentals=0,
                                      bytes_accessed=bytes_accessed),
    )(*operands)
    return out[:n]


if __name__ == "__main__":
    key = jax.random.PRNGKey(0)
    k_x, k_w, k_b, k_w2, k_b2, k_e0, k_e1 = jax.random.split(key, 7)

    N = 16        # number of graph nodes
    F_IN = 8      # in_channels of the wrapped GCNConv
    F_OUT = 8     # out_channels of the wrapped GCNConv
    E = 32        # number of directed edges per adjacency

    x = jax.random.normal(k_x, (N, F_IN), dtype=jnp.float32)
    # W stored as [F_in, F_out] (== GCNConv's weight transposed).
    w = jax.random.normal(k_w, (F_IN, F_OUT), dtype=jnp.float32) / jnp.sqrt(
        jnp.float32(F_IN))
    b = 0.1 * jax.random.normal(k_b, (F_OUT,), dtype=jnp.float32)

    # two edge_index sets (use_A = -2 -> one shared layer, two adjacencies)
    edge_index_0 = jax.random.randint(k_e0, (2, E), 0, N, dtype=jnp.int32)
    edge_index_1 = jax.random.randint(k_e1, (2, E), 0, N, dtype=jnp.int32)

    # pure-JAX PyG-equivalent reference
    def ref_gcn(edge_index, weight, bias):
        src, dst = edge_index[0], edge_index[1]
        ew = jnp.where(src != dst, 1.0, 0.0)
        adj = jnp.zeros((N, N), jnp.float32).at[dst, src].add(ew) + jnp.eye(N)
        dis = 1.0 / jnp.sqrt(adj.sum(axis=1))
        a_hat = adj * dis[:, None] * dis[None, :]
        return a_hat @ (x @ weight) + bias.reshape(1, -1)

    ref = jnp.concatenate(
        [ref_gcn(edge_index_0, w, b), ref_gcn(edge_index_1, w, b)], axis=1)

    # default path: bf16 operands, f32 accumulate, x@W precomputed + VMEM resident
    out = agcn_conv_forward(x, [edge_index_0, edge_index_1], w, b, use_A=-2)
    out = jax.block_until_ready(out)
    assert out.shape == (N, 2 * F_OUT), out.shape
    assert bool(jnp.all(jnp.isfinite(out)))
    assert jnp.allclose(out, ref, atol=5e-2, rtol=5e-2), \
        float(jnp.max(jnp.abs(out - ref)))

    # f32-operand path (reference accuracy)
    out_f32 = agcn_conv_forward(x, [edge_index_0, edge_index_1], w, b, use_A=-2,
                                operand_dtype=jnp.float32)
    out_f32 = jax.block_until_ready(out_f32)
    assert jnp.allclose(out_f32, ref, atol=1e-4, rtol=1e-4)

    # F_in < F_out exercises the (A@x)@W association with W applied in finalize
    F_OUT2 = 16
    w2 = jax.random.normal(k_w2, (F_IN, F_OUT2), dtype=jnp.float32) / jnp.sqrt(
        jnp.float32(F_IN))
    b2 = 0.1 * jax.random.normal(k_b2, (F_OUT2,), dtype=jnp.float32)
    ref2 = jnp.concatenate(
        [ref_gcn(edge_index_0, w2, b2), ref_gcn(edge_index_1, w2, b2)], axis=1)
    out2 = agcn_conv_forward(x, [edge_index_0, edge_index_1], w2, b2, use_A=-2,
                             operand_dtype=jnp.float32)
    out2 = jax.block_until_ready(out2)
    assert out2.shape == (N, 2 * F_OUT2)
    assert jnp.allclose(out2, ref2, atol=1e-4, rtol=1e-4)

    # streamed-feature fallback branch (feature matrix not kept VMEM-resident)
    out3 = agcn_conv_forward(x, [edge_index_0, edge_index_1], w, b, use_A=-2,
                             operand_dtype=jnp.float32, feat_resident=False)
    out3 = jax.block_until_ready(out3)
    assert jnp.allclose(out3, ref, atol=1e-4, rtol=1e-4)

    print("KERNEL_OK")
</pallas_src>

<mosaic_0001>
module attributes {stable_mosaic.version = 11 : i64} {
  func.func @_agcn_fused_kernel(%arg0: i32, %arg1: i32, %arg2: memref<128x128xbf16, #tpu.memory_space<vmem>>, %arg3: memref<128x128xbf16, #tpu.memory_space<vmem>>, %arg4: memref<128x8xbf16, #tpu.memory_space<vmem>>, %arg5: memref<1x8xf32, #tpu.memory_space<vmem>>, %arg6: memref<128x16xf32, #tpu.memory_space<vmem>>, %arg7: memref<128x8xf32, #tpu.memory_space<vmem>>, %arg8: memref<128x8xf32, #tpu.memory_space<vmem>>) attributes {dimension_semantics = [#tpu.dimension_semantics<parallel>, #tpu.dimension_semantics<arbitrary>], iteration_bounds = array<i64: 1, 1>, scalar_prefetch = 0 : i64, scratch_operands = 2 : i64, tpu.core_type = #tpu.core_type<tc>, window_params = [{transform_indices = @transform_0, window_bounds = array<i64: 128, 128>}, {transform_indices = @transform_1, window_bounds = array<i64: 128, 128>}, {pipeline_mode = #tpu.pipeline_mode<synchronous>, transform_indices = @transform_2, window_bounds = array<i64: 128, 8>}, {pipeline_mode = #tpu.pipeline_mode<synchronous>, transform_indices = @transform_3, window_bounds = array<i64: 1, 8>}, {transform_indices = @transform_4, window_bounds = array<i64: 128, 16>}]} {
    %c0_i32 = arith.constant 0 : i32
    %0 = arith.cmpi eq, %arg1, %c0_i32 : i32
    %1 = arith.extui %0 : i1 to i32
    %c0_i32_0 = arith.constant 0 : i32
    %2 = arith.cmpi ne, %1, %c0_i32_0 : i32
    scf.if %2 {
      %cst_16 = arith.constant 0.000000e+00 : f32
      %20 = vector.broadcast %cst_16 : f32 to vector<128x8xf32>
      %c0_17 = arith.constant 0 : index
      %c0_18 = arith.constant 0 : index
      %21 = vector.load %arg7[%c0_17, %c0_18] : memref<128x8xf32, #tpu.memory_space<vmem>>, vector<128x8xf32>
      tpu.vector_store %arg7[%c0_17, %c0_18], %20 {strides = array<i32>} : memref<128x8xf32, #tpu.memory_space<vmem>>, vector<128x8xf32>,
      %cst_19 = arith.constant 0.000000e+00 : f32
      %22 = vector.broadcast %cst_19 : f32 to vector<128x8xf32>
      %c0_20 = arith.constant 0 : index
      %c0_21 = arith.constant 0 : index
      %23 = vector.load %arg8[%c0_20, %c0_21] : memref<128x8xf32, #tpu.memory_space<vmem>>, vector<128x8xf32>
      tpu.vector_store %arg8[%c0_20, %c0_21], %22 {strides = array<i32>} : memref<128x8xf32, #tpu.memory_space<vmem>>, vector<128x8xf32>,
    } else {
    }
    %c128_i32 = arith.constant 128 : i32
    %3 = arith.muli %arg1, %c128_i32 : i32
    %4 = tpu.assume_multiple %3, 128 : i32
    %5 = arith.index_cast %4 : i32 to index
    %c0 = arith.constant 0 : index
    %6 = vector.load %arg4[%5, %c0] : memref<128x8xbf16, #tpu.memory_space<vmem>>, vector<128x8xbf16>
    %c0_1 = arith.constant 0 : index
    %c0_2 = arith.constant 0 : index
    %7 = vector.load %arg7[%c0_1, %c0_2] : memref<128x8xf32, #tpu.memory_space<vmem>>, vector<128x8xf32>
    %c0_3 = arith.constant 0 : index
    %c0_4 = arith.constant 0 : index
    %8 = vector.load %arg2[%c0_3, %c0_4] : memref<128x128xbf16, #tpu.memory_space<vmem>>, vector<128x128xbf16>
    %cst = arith.constant dense<0.000000e+00> : vector<128x8xf32>
    %9 = tpu.matmul %8, %6, %cst {dimension_numbers = #tpu.dot_dimension_numbers<[1], [0], [0], [1], [0, 0, 1, 1], [], []>} : vector<128x128xbf16>, vector<128x8xbf16>, vector<128x8xf32> -> vector<128x8xf32>
    %10 = arith.addf %7, %9 : vector<128x8xf32>
    %c0_5 = arith.constant 0 : index
    %c0_6 = arith.constant 0 : index
    %11 = vector.load %arg7[%c0_5, %c0_6] : memref<128x8xf32, #tpu.memory_space<vmem>>, vector<128x8xf32>
    tpu.vector_store %arg7[%c0_5, %c0_6], %10 {strides = array<i32>} : memref<128x8xf32, #tpu.memory_space<vmem>>, vector<128x8xf32>,
    %c0_7 = arith.constant 0 : index
    %c0_8 = arith.constant 0 : index
    %12 = vector.load %arg8[%c0_7, %c0_8] : memref<128x8xf32, #tpu.memory_space<vmem>>, vector<128x8xf32>
    %c0_9 = arith.constant 0 : index
    %c0_10 = arith.constant 0 : index
    %13 = vector.load %arg3[%c0_9, %c0_10] : memref<128x128xbf16, #tpu.memory_space<vmem>>, vector<128x128xbf16>
    %cst_11 = arith.constant dense<0.000000e+00> : vector<128x8xf32>
    %14 = tpu.matmul %13, %6, %cst_11 {dimension_numbers = #tpu.dot_dimension_numbers<[1], [0], [0], [1], [0, 0, 1, 1], [], []>} : vector<128x128xbf16>, vector<128x8xbf16>, vector<128x8xf32> -> vector<128x8xf32>
    %15 = arith.addf %12, %14 : vector<128x8xf32>
    %c0_12 = arith.constant 0 : index
    %c0_13 = arith.constant 0 : index
    %16 = vector.load %arg8[%c0_12, %c0_13] : memref<128x8xf32, #tpu.memory_space<vmem>>, vector<128x8xf32>
    tpu.vector_store %arg8[%c0_12, %c0_13], %15 {strides = array<i32>} : memref<128x8xf32, #tpu.memory_space<vmem>>, vector<128x8xf32>,
    %c0_i32_14 = arith.constant 0 : i32
    %17 = arith.cmpi eq, %arg1, %c0_i32_14 : i32
    %18 = arith.extui %17 : i1 to i32
    %c0_i32_15 = arith.constant 0 : i32
    %19 = arith.cmpi ne, %18, %c0_i32_15 : i32
    scf.if %19 {
      %c0_16 = arith.constant 0 : index
      %c0_17 = arith.constant 0 : index
      %20 = vector.load %arg5[%c0_16, %c0_17] : memref<1x8xf32, #tpu.memory_space<vmem>>, vector<1x8xf32>
      %c0_18 = arith.constant 0 : index
      %c0_19 = arith.constant 0 : index
      %21 = vector.load %arg7[%c0_18, %c0_19] : memref<128x8xf32, #tpu.memory_space<vmem>>, vector<128x8xf32>
      %22 = vector.broadcast %20 : vector<1x8xf32> to vector<128x8xf32>
      %23 = arith.addf %21, %22 : vector<128x8xf32>
      %c0_20 = arith.constant 0 : index
      %c0_21 = arith.constant 0 : index
      %24 = vector.load %arg8[%c0_20, %c0_21] : memref<128x8xf32, #tpu.memory_space<vmem>>, vector<128x8xf32>
      %25 = vector.broadcast %20 : vector<1x8xf32> to vector<128x8xf32>
      %26 = arith.addf %24, %25 : vector<128x8xf32>
      %27 = tpu.iota {dimensions = array<i32: 0>} : vector<8x16xi32>
      %28 = tpu.iota {dimensions = array<i32: 1>} : vector<8x16xi32>
      %29 = arith.cmpi eq, %28, %27 : vector<8x16xi32>
      %30 = arith.extui %29 : vector<8x16xi1> to vector<8x16xi32>
      %31 = arith.sitofp %30 : vector<8x16xi32> to vector<8x16xf32>
      %c8_i32 = arith.constant 8 : i32
      %32 = vector.broadcast %c8_i32 : i32 to vector<8x16xi32>
      %33 = arith.addi %27, %32 : vector<8x16xi32>
      %34 = arith.cmpi eq, %28, %33 : vector<8x16xi32>
      %35 = arith.extui %34 : vector<8x16xi1> to vector<8x16xi32>
      %36 = arith.sitofp %35 : vector<8x16xi32> to vector<8x16xf32>
      %cst_22 = arith.constant dense<0.000000e+00> : vector<128x16xf32>
      %37 = tpu.matmul %23, %31, %cst_22 {dimension_numbers = #tpu.dot_dimension_numbers<[1], [0], [0], [1], [0, 0, 1, 1], [], []>} : vector<128x8xf32>, vector<8x16xf32>, vector<128x16xf32> -> vector<128x16xf32>
      %cst_23 = arith.constant dense<0.000000e+00> : vector<128x16xf32>
      %38 = tpu.matmul %26, %36, %cst_23 {dimension_numbers = #tpu.dot_dimension_numbers<[1], [0], [0], [1], [0, 0, 1, 1], [], []>} : vector<128x8xf32>, vector<8x16xf32>, vector<128x16xf32> -> vector<128x16xf32>
      %39 = arith.addf %37, %38 : vector<128x16xf32>
      %c0_24 = arith.constant 0 : index
      %c0_25 = arith.constant 0 : index
      %40 = vector.load %arg6[%c0_24, %c0_25] : memref<128x16xf32, #tpu.memory_space<vmem>>, vector<128x16xf32>
      tpu.vector_store %arg6[%c0_24, %c0_25], %39 {strides = array<i32>} : memref<128x16xf32, #tpu.memory_space<vmem>>, vector<128x16xf32>,
    } else {
    }
    return
  }
  func.func @transform_0(%arg0: i32, %arg1: i32) -> (i32, i32) {
    %c0_i32 = arith.constant 0 : i32
    return %arg0, %arg1 : i32, i32
  }
  func.func @transform_1(%arg0: i32, %arg1: i32) -> (i32, i32) {
    %c0_i32 = arith.constant 0 : i32
    return %arg0, %arg1 : i32, i32
  }
  func.func @transform_2(%arg0: i32, %arg1: i32) -> (i32, i32) {
    %c0_i32 = arith.constant 0 : i32
    %c0_i32_0 = arith.constant 0 : i32
    %c0_i32_1 = arith.constant 0 : i32
    return %c0_i32, %c0_i32_0 : i32, i32
  }
  func.func @transform_3(%arg0: i32, %arg1: i32) -> (i32, i32) {
    %c0_i32 = arith.constant 0 : i32
    %c0_i32_0 = arith.constant 0 : i32
    %c0_i32_1 = arith.constant 0 : i32
    return %c0_i32, %c0_i32_0 : i32, i32
  }
  func.func @transform_4(%arg0: i32, %arg1: i32) -> (i32, i32) {
    %c0_i32 = arith.constant 0 : i32
    %c0_i32_0 = arith.constant 0 : i32
    return %arg0, %c0_i32 : i32, i32
  }
}

</mosaic_0001>

<llo_original>
// kernel: tpu_custom_call.1
$region0: #{tpu_custom_call.1}
  #allocation0 [shape = 'u32[]', space=smem, size = 0x4, offset = 0x4, fixed_abs, tag = 'smem constant byte address 0x4 - core index']
  #allocation1 [shape = 'u32[144,128]{1,0:T(1,128)}', space=vmem, size = 0x12000, scoped, tag = 'internal scratch']
  #allocation2 [shape = 'f32[128,8]{1,0:T(8,128)}', space=vmem, size = 0x10000, scoped, tag = 'scratch operand']
  #allocation3 [shape = 'f32[128,8]{1,0:T(8,128)}', space=vmem, size = 0x10000, scoped, tag = 'scratch operand']
  %s0 = inlined_call_operand.vmem [shape: bf16[128,128], index: 0, kind: input, shape index: {}]
  %s1 = inlined_call_operand.hbm [shape: bf16[128,128], index: 1, kind: input, shape index: {}]
  %s2 = inlined_call_operand.vmem [shape: bf16[128,8], index: 2, kind: input, shape index: {}]
  %s3 = inlined_call_operand.vmem [shape: f32[1,8], index: 3, kind: input, shape index: {}]
  %s4 = inlined_call_operand.vmem [shape: f32[128,16], index: 4, kind: output, shape index: {}]
  %s5 = sld [smem:[#allocation0]]
  $region38: #{tpu_custom_call.1} parent=0
    _
  %s7 = ssub.s32 1, %s5
  %s8 = scalar_select 0, %s7, %s5
  $region1: #{tpu_custom_call.1} parent=0
    #allocation4 [shape = 'u8[32768]{0}', space=vmem, size = 0x8000, scoped, tag = 'input window, operand 1, single buffered']
    #allocation5 [shape = 's32[1]{0}', space=sflag, size = 0x4, scoped, tag = 'scoped memory for tpu_custom_call.1']
    %9 = vsyncpa [#allocation5], 0
    // Predicated region
    $region2: #{tpu_custom_call.1} parent=1 // pred_check
      _
    $region3: #{tpu_custom_call.1} parent=1 // pred_check_branch
      %11 = sbr.rel (0) target = $region5
    $region4: #{tpu_custom_call.1} parent=1 // pred_region
      _
    $region5: #{tpu_custom_call.1} parent=1 // pred_fallthru
      _
    // Predicated region
    $region6: #{tpu_custom_call.1} parent=1 // pred_check
      _
    $region7: #{tpu_custom_call.1} parent=1 // pred_check_branch
      %13 = sbr.rel (0) target = $region9
    $region8: #{tpu_custom_call.1} parent=1 // pred_region
      %s15 = ssub.s32 1024, 1024
      %16 = vsyncadd [#allocation5], %s15
      %s17 = sshll.u32 [#allocation4], 4
      %s18 = int_to_ptr.vmem [resolvable:$true] %s17
      %23 = dma.hbm_to_vmem [thread:$0]  %s1, 1024, %s18, [#allocation5], 64, 64, 4
    $region9: #{tpu_custom_call.1} parent=1 // pred_fallthru
      _
    // Predicated region
    $region10: #{tpu_custom_call.1} parent=1 // pred_check
      _
    $region11: #{tpu_custom_call.1} parent=1 // pred_check_branch
      %25 = sbr.rel (0) target = $region13
    $region12: #{tpu_custom_call.1} parent=1 // pred_region
      _
    $region13: #{tpu_custom_call.1} parent=1 // pred_fallthru
      _
    // Predicated region
    $region14: #{tpu_custom_call.1} parent=1 // pred_check
      _
    $region15: #{tpu_custom_call.1} parent=1 // pred_check_branch
      %27 = sbr.rel (0) target = $region17
    $region16: #{tpu_custom_call.1} parent=1 // pred_region
      _
    $region17: #{tpu_custom_call.1} parent=1 // pred_fallthru
      _
    // Predicated region
    $region18: #{tpu_custom_call.1} parent=1 // pred_check
      _
    $region19: #{tpu_custom_call.1} parent=1 // pred_check_branch
      %29 = sbr.rel (0) target = $region21
    $region20: #{tpu_custom_call.1} parent=1 // pred_region
      %30 = dma.done [#allocation5], 1024
    $region21: #{tpu_custom_call.1} parent=1 // pred_fallthru
      _
    %p32 = scmp.eq.s32.totalorder 0, 0
    // Predicated region
    $region22: #{tpu_custom_call.1} parent=1 // pred_check
      %p33 = pneg %p32
    $region23: #{tpu_custom_call.1} parent=1 // pred_check_branch
      %35 = sbr.rel (%p33) target = $region25
    $region24: #{tpu_custom_call.1} parent=1 // pred_region
      %vm36 = vcmask 64512
      %37 = vst.msk [vmem:[#allocation2] sm:$0xff] %vm36, 0.0
      %38 = vst.msk [vmem:[#allocation2 + $0x8] sm:$0xff] %vm36, 0.0
      %39 = vst.msk [vmem:[#allocation2 + $0x10] sm:$0xff] %vm36, 0.0
      %40 = vst.msk [vmem:[#allocation2 + $0x18] sm:$0xff] %vm36, 0.0
      %41 = vst.msk [vmem:[#allocation2 + $0x20] sm:$0xff] %vm36, 0.0
      %42 = vst.msk [vmem:[#allocation2 + $0x28] sm:$0xff] %vm36, 0.0
      %43 = vst.msk [vmem:[#allocation2 + $0x30] sm:$0xff] %vm36, 0.0
      %44 = vst.msk [vmem:[#allocation2 + $0x38] sm:$0xff] %vm36, 0.0
      %45 = vst.msk [vmem:[#allocation2 + $0x40] sm:$0xff] %vm36, 0.0
      %46 = vst.msk [vmem:[#allocation2 + $0x48] sm:$0xff] %vm36, 0.0
      %47 = vst.msk [vmem:[#allocation2 + $0x50] sm:$0xff] %vm36, 0.0
      %48 = vst.msk [vmem:[#allocation2 + $0x58] sm:$0xff] %vm36, 0.0
      %49 = vst.msk [vmem:[#allocation2 + $0x60] sm:$0xff] %vm36, 0.0
      %50 = vst.msk [vmem:[#allocation2 + $0x68] sm:$0xff] %vm36, 0.0
      %51 = vst.msk [vmem:[#allocation2 + $0x70] sm:$0xff] %vm36, 0.0
      %52 = vst.msk [vmem:[#allocation2 + $0x78] sm:$0xff] %vm36, 0.0
      %53 = vst.msk [vmem:[#allocation3] sm:$0xff] %vm36, 0.0
      %54 = vst.msk [vmem:[#allocation3 + $0x8] sm:$0xff] %vm36, 0.0
      %55 = vst.msk [vmem:[#allocation3 + $0x10] sm:$0xff] %vm36, 0.0
      %56 = vst.msk [vmem:[#allocation3 + $0x18] sm:$0xff] %vm36, 0.0
      %57 = vst.msk [vmem:[#allocation3 + $0x20] sm:$0xff] %vm36, 0.0
      %58 = vst.msk [vmem:[#allocation3 + $0x28] sm:$0xff] %vm36, 0.0
      %59 = vst.msk [vmem:[#allocation3 + $0x30] sm:$0xff] %vm36, 0.0
      %60 = vst.msk [vmem:[#allocation3 + $0x38] sm:$0xff] %vm36, 0.0
      %61 = vst.msk [vmem:[#allocation3 + $0x40] sm:$0xff] %vm36, 0.0
      %62 = vst.msk [vmem:[#allocation3 + $0x48] sm:$0xff] %vm36, 0.0
      %63 = vst.msk [vmem:[#allocation3 + $0x50] sm:$0xff] %vm36, 0.0
      %64 = vst.msk [vmem:[#allocation3 + $0x58] sm:$0xff] %vm36, 0.0
      %65 = vst.msk [vmem:[#allocation3 + $0x60] sm:$0xff] %vm36, 0.0
      %66 = vst.msk [vmem:[#allocation3 + $0x68] sm:$0xff] %vm36, 0.0
      %67 = vst.msk [vmem:[#allocation3 + $0x70] sm:$0xff] %vm36, 0.0
      %68 = vst.msk [vmem:[#allocation3 + $0x78] sm:$0xff] %vm36, 0.0
    $region25: #{tpu_custom_call.1} parent=1 // pred_fallthru
      _
    %s69 = smul.u32 0, 128
    %s70 = sshra.s32 %s69, 3
    %s71 = sand.u32 %s69, 7
    %s72 = smul.addr %s70, 4
    %s73 = scalar_lea.vmem %s2, %s72
    %v74 = vld [vmem:[%s73] sm:$0xf]
    %v75 = vld [vmem:[%s73 + $0x4] sm:$0xf]
    %v76 = vld [vmem:[%s73 + $0x8] sm:$0xf]
    %v77 = vld [vmem:[%s73 + $0xc] sm:$0xf]
    %v78 = vld [vmem:[%s73 + $0x10] sm:$0xf]
    %v79 = vld [vmem:[%s73 + $0x14] sm:$0xf]
    %v80 = vld [vmem:[%s73 + $0x18] sm:$0xf]
    %v81 = vld [vmem:[%s73 + $0x1c] sm:$0xf]
    %v82 = vld [vmem:[%s73 + $0x20] sm:$0xf]
    %v83 = vld [vmem:[%s73 + $0x24] sm:$0xf]
    %v84 = vld [vmem:[%s73 + $0x28] sm:$0xf]
    %v85 = vld [vmem:[%s73 + $0x2c] sm:$0xf]
    %v86 = vld [vmem:[%s73 + $0x30] sm:$0xf]
    %v87 = vld [vmem:[%s73 + $0x34] sm:$0xf]
    %v88 = vld [vmem:[%s73 + $0x38] sm:$0xf]
    %v89 = vld [vmem:[%s73 + $0x3c] sm:$0xf]
    %v90 = vld [vmem:[#allocation2] sm:$0xff]
    %v91 = vld [vmem:[#allocation2 + $0x8] sm:$0xff]
    %v92 = vld [vmem:[#allocation2 + $0x10] sm:$0xff]
    %v93 = vld [vmem:[#allocation2 + $0x18] sm:$0xff]
    %v94 = vld [vmem:[#allocation2 + $0x20] sm:$0xff]
    %v95 = vld [vmem:[#allocation2 + $0x28] sm:$0xff]
    %v96 = vld [vmem:[#allocation2 + $0x30] sm:$0xff]
    %v97 = vld [vmem:[#allocation2 + $0x38] sm:$0xff]
    %v98 = vld [vmem:[#allocation2 + $0x40] sm:$0xff]
    %v99 = vld [vmem:[#allocation2 + $0x48] sm:$0xff]
    %v100 = vld [vmem:[#allocation2 + $0x50] sm:$0xff]
    %v101 = vld [vmem:[#allocation2 + $0x58] sm:$0xff]
    %v102 = vld [vmem:[#allocation2 + $0x60] sm:$0xff]
    %v103 = vld [vmem:[#allocation2 + $0x68] sm:$0xff]
    %v104 = vld [vmem:[#allocation2 + $0x70] sm:$0xff]
    %v105 = vld [vmem:[#allocation2 + $0x78] sm:$0xff]
    %v106 = vld [vmem:[%s0] sm:$0xf]
    %v107 = vld [vmem:[%s0 + $0x4] sm:$0xf]
    %v108 = vld [vmem:[%s0 + $0x8] sm:$0xf]
    %v109 = vld [vmem:[%s0 + $0xc] sm:$0xf]
    %v110 = vld [vmem:[%s0 + $0x10] sm:$0xf]
    %v111 = vld [vmem:[%s0 + $0x14] sm:$0xf]
    %v112 = vld [vmem:[%s0 + $0x18] sm:$0xf]
    %v113 = vld [vmem:[%s0 + $0x1c] sm:$0xf]
    %v114 = vld [vmem:[%s0 + $0x20] sm:$0xf]
    %v115 = vld [vmem:[%s0 + $0x24] sm:$0xf]
    %v116 = vld [vmem:[%s0 + $0x28] sm:$0xf]
    %v117 = vld [vmem:[%s0 + $0x2c] sm:$0xf]
    %v118 = vld [vmem:[%s0 + $0x30] sm:$0xf]
    %v119 = vld [vmem:[%s0 + $0x34] sm:$0xf]
    %v120 = vld [vmem:[%s0 + $0x38] sm:$0xf]
    %v121 = vld [vmem:[%s0 + $0x3c] sm:$0xf]
    %v138 = vunpack.c.l.b16 %v106
    %v139 = vunpack.c.l.b16 %v107
    %v140 = vunpack.c.l.b16 %v108
    %v141 = vunpack.c.l.b16 %v109
    %v142 = vunpack.c.l.b16 %v110
    %v143 = vunpack.c.l.b16 %v111
    %v144 = vunpack.c.l.b16 %v112
    %v145 = vunpack.c.l.b16 %v113
    %v146 = vunpack.c.l.b16 %v114
    %v147 = vunpack.c.l.b16 %v115
    %v148 = vunpack.c.l.b16 %v116
    %v149 = vunpack.c.l.b16 %v117
    %v150 = vunpack.c.l.b16 %v118
    %v151 = vunpack.c.l.b16 %v119
    %v152 = vunpack.c.l.b16 %v120
    %v153 = vunpack.c.l.b16 %v121
    %v154 = vpack.c.b16 %v139, %v138
    %v155 = vpack.c.b16 %v141, %v140
    %v156 = vpack.c.b16 %v143, %v142
    %v157 = vpack.c.b16 %v145, %v144
    %v158 = vpack.c.b16 %v147, %v146
    %v159 = vpack.c.b16 %v149, %v148
    %v160 = vpack.c.b16 %v151, %v150
    %v161 = vpack.c.b16 %v153, %v152
    %v186 = vunpack.c.l.b16 %v74
    %v187 = vunpack.c.l.b16 %v75
    %v188 = vunpack.c.l.b16 %v76
    %v189 = vunpack.c.l.b16 %v77
    %v190 = vunpack.c.l.b16 %v78
    %v191 = vunpack.c.l.b16 %v79
    %v192 = vunpack.c.l.b16 %v80
    %v193 = vunpack.c.l.b16 %v81
    %v194 = vunpack.c.l.b16 %v82
    %v195 = vunpack.c.l.b16 %v83
    %v196 = vunpack.c.l.b16 %v84
    %v197 = vunpack.c.l.b16 %v85
    %v198 = vunpack.c.l.b16 %v86
    %v199 = vunpack.c.l.b16 %v87
    %v200 = vunpack.c.l.b16 %v88
    %v201 = vunpack.c.l.b16 %v89
    %v202 = vpack.c.b16 %v187, %v186
    %v203 = vpack.c.b16 %v189, %v188
    %v204 = vpack.c.b16 %v191, %v190
    %v205 = vpack.c.b16 %v193, %v192
    %v206 = vpack.c.b16 %v195, %v194
    %v207 = vpack.c.b16 %v197, %v196
    %v208 = vpack.c.b16 %v199, %v198
    %v209 = vpack.c.b16 %v201, %v200
    %218 = vmatprep.subr.bf16.mxu0 0
    %219 = vmatpush1.bf16.msra.mxu0 %v202
    %220 = vmatprep.subr.bf16.mxu0 0
    %221 = vmatpush1.bf16.msra.mxu0 %v203
    %222 = vmatprep.subr.bf16.mxu0 0
    %223 = vmatpush1.bf16.msra.mxu0 %v204
    %224 = vmatprep.subr.bf16.mxu0 0
    %225 = vmatpush1.bf16.msra.mxu0 %v205
    %226 = vmatprep.subr.bf16.mxu0 0
    %227 = vmatpush1.bf16.msra.mxu0 %v206
    %228 = vmatprep.subr.bf16.mxu0 0
    %229 = vmatpush1.bf16.msra.mxu0 %v207
    %230 = vmatprep.subr.bf16.mxu0 0
    %231 = vmatpush1.bf16.msra.mxu0 %v208
    %232 = vmatprep.subr.bf16.mxu0 0
    %233 = vmatpush1.bf16.msra.mxu0 %v209
    %234 = vmatprep.subr.bf16.mxu0 0
    %235 = vmatpush1.bf16.msra.mxu0 0
    %236 = vmatprep.subr.bf16.mxu0 0
    %237 = vmatpush1.bf16.msra.mxu0 0
    %238 = vmatprep.subr.bf16.mxu0 0
    %239 = vmatpush1.bf16.msra.mxu0 0
    %240 = vmatprep.subr.bf16.mxu0 0
    %241 = vmatpush1.bf16.msra.mxu0 0
    %242 = vmatprep.subr.bf16.mxu0 0
    %243 = vmatpush1.bf16.msra.mxu0 0
    %244 = vmatprep.subr.bf16.mxu0 0
    %245 = vmatpush1.bf16.msra.mxu0 0
    %246 = vmatprep.subr.bf16.mxu0 0
    %247 = vmatpush1.bf16.msra.mxu0 0
    %248 = vmatprep.subr.bf16.mxu0 0
    %249 = vmatpush1.bf16.msra.mxu0 0
    %250 = vmatprep.mubr.bf16.mxu0 0
    %251 = vmatmul.mubr.bf16.gmra.mrb[0].mxu0 %v154
    %v252 = vpop.f32.mrb[0].mxu0
    %v253 = vadd.f32 0.0, %v252
    %v254 = vpop.f32.mrb[0].mxu0
    %v255 = vpop.f32.mrb[0].mxu0
    %v256 = vadd.f32 0.0, %v255
    %v257 = vpop.f32.mrb[0].mxu0
    %258 = vmatprep.mubr.bf16.mxu0 0
    %259 = vmatmul.mubr.bf16.gmra.mrb[0].mxu0 %v155
    %v260 = vpop.f32.mrb[0].mxu0
    %v261 = vadd.f32 0.0, %v260
    %v262 = vpop.f32.mrb[0].mxu0
    %v263 = vpop.f32.mrb[0].mxu0
    %v264 = vadd.f32 0.0, %v263
    %v265 = vpop.f32.mrb[0].mxu0
    %266 = vmatprep.mubr.bf16.mxu0 0
    %267 = vmatmul.mubr.bf16.gmra.mrb[0].mxu0 %v156
    %v268 = vpop.f32.mrb[0].mxu0
    %v269 = vadd.f32 0.0, %v268
    %v270 = vpop.f32.mrb[0].mxu0
    %v271 = vpop.f32.mrb[0].mxu0
    %v272 = vadd.f32 0.0, %v271
    %v273 = vpop.f32.mrb[0].mxu0
    %274 = vmatprep.mubr.bf16.mxu0 0
    %275 = vmatmul.mubr.bf16.gmra.mrb[0].mxu0 %v157
    %v276 = vpop.f32.mrb[0].mxu0
    %v277 = vadd.f32 0.0, %v276
    %v278 = vpop.f32.mrb[0].mxu0
    %v279 = vpop.f32.mrb[0].mxu0
    %v280 = vadd.f32 0.0, %v279
    %v281 = vpop.f32.mrb[0].mxu0
    %282 = vmatprep.mubr.bf16.mxu0 0
    %283 = vmatmul.mubr.bf16.gmra.mrb[0].mxu0 %v158
    %v284 = vpop.f32.mrb[0].mxu0
    %v285 = vadd.f32 0.0, %v284
    %v286 = vpop.f32.mrb[0].mxu0
    %v287 = vpop.f32.mrb[0].mxu0
    %v288 = vadd.f32 0.0, %v287
    %v289 = vpop.f32.mrb[0].mxu0
    %290 = vmatprep.mubr.bf16.mxu0 0
    %291 = vmatmul.mubr.bf16.gmra.mrb[0].mxu0 %v159
    %v292 = vpop.f32.mrb[0].mxu0
    %v293 = vadd.f32 0.0, %v292
    %v294 = vpop.f32.mrb[0].mxu0
    %v295 = vpop.f32.mrb[0].mxu0
    %v296 = vadd.f32 0.0, %v295
    %v297 = vpop.f32.mrb[0].mxu0
    %298 = vmatprep.mubr.bf16.mxu0 0
    %299 = vmatmul.mubr.bf16.gmra.mrb[0].mxu0 %v160
    %v300 = vpop.f32.mrb[0].mxu0
    %v301 = vadd.f32 0.0, %v300
    %v302 = vpop.f32.mrb[0].mxu0
    %v303 = vpop.f32.mrb[0].mxu0
    %v304 = vadd.f32 0.0, %v303
    %v305 = vpop.f32.mrb[0].mxu0
    %306 = vmatprep.mubr.bf16.mxu0 0
    %307 = vmatmul.mubr.bf16.gmra.mrb[0].mxu0 %v161
    %v308 = vpop.f32.mrb[0].mxu0
    %v309 = vadd.f32 0.0, %v308
    %v310 = vpop.f32.mrb[0].mxu0
    %v311 = vpop.f32.mrb[0].mxu0
    %v312 = vadd.f32 0.0, %v311
    %v313 = vpop.f32.mrb[0].mxu0
    %314 = vdwg.mxu0
    %v315 = vadd.f32 %v90, %v253
    %v316 = vadd.f32 %v91, %v256
    %v317 = vadd.f32 %v92, %v261
    %v318 = vadd.f32 %v93, %v264
    %v319 = vadd.f32 %v94, %v269
    %v320 = vadd.f32 %v95, %v272
    %v321 = vadd.f32 %v96, %v277
    %v322 = vadd.f32 %v97, %v280
    %v323 = vadd.f32 %v98, %v285
    %v324 = vadd.f32 %v99, %v288
    %v325 = vadd.f32 %v100, %v293
    %v326 = vadd.f32 %v101, %v296
    %v327 = vadd.f32 %v102, %v301
    %v328 = vadd.f32 %v103, %v304
    %v329 = vadd.f32 %v104, %v309
    %v330 = vadd.f32 %v105, %v312
    %vm331 = vcmask 64512
    %332 = vst.msk [vmem:[#allocation2] sm:$0xff] %vm331, %v315
    %333 = vst.msk [vmem:[#allocation2 + $0x8] sm:$0xff] %vm331, %v316
    %334 = vst.msk [vmem:[#allocation2 + $0x10] sm:$0xff] %vm331, %v317
    %335 = vst.msk [vmem:[#allocation2 + $0x18] sm:$0xff] %vm331, %v318
    %336 = vst.msk [vmem:[#allocation2 + $0x20] sm:$0xff] %vm331, %v319
    %337 = vst.msk [vmem:[#allocation2 + $0x28] sm:$0xff] %vm331, %v320
    %338 = vst.msk [vmem:[#allocation2 + $0x30] sm:$0xff] %vm331, %v321
    %339 = vst.msk [vmem:[#allocation2 + $0x38] sm:$0xff] %vm331, %v322
    %340 = vst.msk [vmem:[#allocation2 + $0x40] sm:$0xff] %vm331, %v323
    %341 = vst.msk [vmem:[#allocation2 + $0x48] sm:$0xff] %vm331, %v324
    %342 = vst.msk [vmem:[#allocation2 + $0x50] sm:$0xff] %vm331, %v325
    %343 = vst.msk [vmem:[#allocation2 + $0x58] sm:$0xff] %vm331, %v326
    %344 = vst.msk [vmem:[#allocation2 + $0x60] sm:$0xff] %vm331, %v327
    %345 = vst.msk [vmem:[#allocation2 + $0x68] sm:$0xff] %vm331, %v328
    %346 = vst.msk [vmem:[#allocation2 + $0x70] sm:$0xff] %vm331, %v329
    %347 = vst.msk [vmem:[#allocation2 + $0x78] sm:$0xff] %vm331, %v330
    %v348 = vld [vmem:[#allocation3] sm:$0xff]
    %v349 = vld [vmem:[#allocation3 + $0x8] sm:$0xff]
    %v350 = vld [vmem:[#allocation3 + $0x10] sm:$0xff]
    %v351 = vld [vmem:[#allocation3 + $0x18] sm:$0xff]
    %v352 = vld [vmem:[#allocation3 + $0x20] sm:$0xff]
    %v353 = vld [vmem:[#allocation3 + $0x28] sm:$0xff]
    %v354 = vld [vmem:[#allocation3 + $0x30] sm:$0xff]
    %v355 = vld [vmem:[#allocation3 + $0x38] sm:$0xff]
    %v356 = vld [vmem:[#allocation3 + $0x40] sm:$0xff]
    %v357 = vld [vmem:[#allocation3 + $0x48] sm:$0xff]
    %v358 = vld [vmem:[#allocation3 + $0x50] sm:$0xff]
    %v359 = vld [vmem:[#allocation3 + $0x58] sm:$0xff]
    %v360 = vld [vmem:[#allocation3 + $0x60] sm:$0xff]
    %v361 = vld [vmem:[#allocation3 + $0x68] sm:$0xff]
    %v362 = vld [vmem:[#allocation3 + $0x70] sm:$0xff]
    %v363 = vld [vmem:[#allocation3 + $0x78] sm:$0xff]
    %v364 = vld [vmem:[#allocation4] sm:$0xf]
    %v365 = vld [vmem:[#allocation4 + $0x4] sm:$0xf]
    %v366 = vld [vmem:[#allocation4 + $0x8] sm:$0xf]
    %v367 = vld [vmem:[#allocation4 + $0xc] sm:$0xf]
    %v368 = vld [vmem:[#allocation4 + $0x10] sm:$0xf]
    %v369 = vld [vmem:[#allocation4 + $0x14] sm:$0xf]
    %v370 = vld [vmem:[#allocation4 + $0x18] sm:$0xf]
    %v371 = vld [vmem:[#allocation4 + $0x1c] sm:$0xf]
    %v372 = vld [vmem:[#allocation4 + $0x20] sm:$0xf]
    %v373 = vld [vmem:[#allocation4 + $0x24] sm:$0xf]
    %v374 = vld [vmem:[#allocation4 + $0x28] sm:$0xf]
    %v375 = vld [vmem:[#allocation4 + $0x2c] sm:$0xf]
    %v376 = vld [vmem:[#allocation4 + $0x30] sm:$0xf]
    %v377 = vld [vmem:[#allocation4 + $0x34] sm:$0xf]
    %v378 = vld [vmem:[#allocation4 + $0x38] sm:$0xf]
    %v379 = vld [vmem:[#allocation4 + $0x3c] sm:$0xf]
    %v396 = vunpack.c.l.b16 %v364
    %v397 = vunpack.c.l.b16 %v365
    %v398 = vunpack.c.l.b16 %v366
    %v399 = vunpack.c.l.b16 %v367
    %v400 = vunpack.c.l.b16 %v368
    %v401 = vunpack.c.l.b16 %v369
    %v402 = vunpack.c.l.b16 %v370
    %v403 = vunpack.c.l.b16 %v371
    %v404 = vunpack.c.l.b16 %v372
    %v405 = vunpack.c.l.b16 %v373
    %v406 = vunpack.c.l.b16 %v374
    %v407 = vunpack.c.l.b16 %v375
    %v408 = vunpack.c.l.b16 %v376
    %v409 = vunpack.c.l.b16 %v377
    %v410 = vunpack.c.l.b16 %v378
    %v411 = vunpack.c.l.b16 %v379
    %v412 = vpack.c.b16 %v397, %v396
    %v413 = vpack.c.b16 %v399, %v398
    %v414 = vpack.c.b16 %v401, %v400
    %v415 = vpack.c.b16 %v403, %v402
    %v416 = vpack.c.b16 %v405, %v404
    %v417 = vpack.c.b16 %v407, %v406
    %v418 = vpack.c.b16 %v409, %v408
    %v419 = vpack.c.b16 %v411, %v410
    %428 = vmatprep.subr.bf16.mxu0 0
    %429 = vmatpush1.bf16.msra.mxu0 %v202
    %430 = vmatprep.subr.bf16.mxu0 0
    %431 = vmatpush1.bf16.msra.mxu0 %v203
    %432 = vmatprep.subr.bf16.mxu0 0
    %433 = vmatpush1.bf16.msra.mxu0 %v204
    %434 = vmatprep.subr.bf16.mxu0 0
    %435 = vmatpush1.bf16.msra.mxu0 %v205
    %436 = vmatprep.subr.bf16.mxu0 0
    %437 = vmatpush1.bf16.msra.mxu0 %v206
    %438 = vmatprep.subr.bf16.mxu0 0
    %439 = vmatpush1.bf16.msra.mxu0 %v207
    %440 = vmatprep.subr.bf16.mxu0 0
    %441 = vmatpush1.bf16.msra.mxu0 %v208
    %442 = vmatprep.subr.bf16.mxu0 0
    %443 = vmatpush1.bf16.msra.mxu0 %v209
    %444 = vmatprep.subr.bf16.mxu0 0
    %445 = vmatpush1.bf16.msra.mxu0 0
    %446 = vmatprep.subr.bf16.mxu0 0
    %447 = vmatpush1.bf16.msra.mxu0 0
    %448 = vmatprep.subr.bf16.mxu0 0
    %449 = vmatpush1.bf16.msra.mxu0 0
    %450 = vmatprep.subr.bf16.mxu0 0
    %451 = vmatpush1.bf16.msra.mxu0 0
    %452 = vmatprep.subr.bf16.mxu0 0
    %453 = vmatpush1.bf16.msra.mxu0 0
    %454 = vmatprep.subr.bf16.mxu0 0
    %455 = vmatpush1.bf16.msra.mxu0 0
    %456 = vmatprep.subr.bf16.mxu0 0
    %457 = vmatpush1.bf16.msra.mxu0 0
    %458 = vmatprep.subr.bf16.mxu0 0
    %459 = vmatpush1.bf16.msra.mxu0 0
    %460 = vmatprep.mubr.bf16.mxu0 0
    %461 = vmatmul.mubr.bf16.gmra.mrb[0].mxu0 %v412
    %v462 = vpop.f32.mrb[0].mxu0
    %v463 = vadd.f32 0.0, %v462
    %v464 = vpop.f32.mrb[0].mxu0
    %v465 = vpop.f32.mrb[0].mxu0
    %v466 = vadd.f32 0.0, %v465
    %v467 = vpop.f32.mrb[0].mxu0
    %468 = vmatprep.mubr.bf16.mxu0 0
    %469 = vmatmul.mubr.bf16.gmra.mrb[0].mxu0 %v413
    %v470 = vpop.f32.mrb[0].mxu0
    %v471 = vadd.f32 0.0, %v470
    %v472 = vpop.f32.mrb[0].mxu0
    %v473 = vpop.f32.mrb[0].mxu0
    %v474 = vadd.f32 0.0, %v473
    %v475 = vpop.f32.mrb[0].mxu0
    %476 = vmatprep.mubr.bf16.mxu0 0
    %477 = vmatmul.mubr.bf16.gmra.mrb[0].mxu0 %v414
    %v478 = vpop.f32.mrb[0].mxu0
    %v479 = vadd.f32 0.0, %v478
    %v480 = vpop.f32.mrb[0].mxu0
    %v481 = vpop.f32.mrb[0].mxu0
    %v482 = vadd.f32 0.0, %v481
    %v483 = vpop.f32.mrb[0].mxu0
    %484 = vmatprep.mubr.bf16.mxu0 0
    %485 = vmatmul.mubr.bf16.gmra.mrb[0].mxu0 %v415
    %v486 = vpop.f32.mrb[0].mxu0
    %v487 = vadd.f32 0.0, %v486
    %v488 = vpop.f32.mrb[0].mxu0
    %v489 = vpop.f32.mrb[0].mxu0
    %v490 = vadd.f32 0.0, %v489
    %v491 = vpop.f32.mrb[0].mxu0
    %492 = vmatprep.mubr.bf16.mxu0 0
    %493 = vmatmul.mubr.bf16.gmra.mrb[0].mxu0 %v416
    %v494 = vpop.f32.mrb[0].mxu0
    %v495 = vadd.f32 0.0, %v494
    %v496 = vpop.f32.mrb[0].mxu0
    %v497 = vpop.f32.mrb[0].mxu0
    %v498 = vadd.f32 0.0, %v497
    %v499 = vpop.f32.mrb[0].mxu0
    %500 = vmatprep.mubr.bf16.mxu0 0
    %501 = vmatmul.mubr.bf16.gmra.mrb[0].mxu0 %v417
    %v502 = vpop.f32.mrb[0].mxu0
    %v503 = vadd.f32 0.0, %v502
    %v504 = vpop.f32.mrb[0].mxu0
    %v505 = vpop.f32.mrb[0].mxu0
    %v506 = vadd.f32 0.0, %v505
    %v507 = vpop.f32.mrb[0].mxu0
    %508 = vmatprep.mubr.bf16.mxu0 0
    %509 = vmatmul.mubr.bf16.gmra.mrb[0].mxu0 %v418
    %v510 = vpop.f32.mrb[0].mxu0
    %v511 = vadd.f32 0.0, %v510
    %v512 = vpop.f32.mrb[0].mxu0
    %v513 = vpop.f32.mrb[0].mxu0
    %v514 = vadd.f32 0.0, %v513
    %v515 = vpop.f32.mrb[0].mxu0
    %516 = vmatprep.mubr.bf16.mxu0 0
    %517 = vmatmul.mubr.bf16.gmra.mrb[0].mxu0 %v419
    %v518 = vpop.f32.mrb[0].mxu0
    %v519 = vadd.f32 0.0, %v518
    %v520 = vpop.f32.mrb[0].mxu0
    %v521 = vpop.f32.mrb[0].mxu0
    %v522 = vadd.f32 0.0, %v521
    %v523 = vpop.f32.mrb[0].mxu0
    %524 = vdwg.mxu0
    %v525 = vadd.f32 %v348, %v463
    %v526 = vadd.f32 %v349, %v466
    %v527 = vadd.f32 %v350, %v471
    %v528 = vadd.f32 %v351, %v474
    %v529 = vadd.f32 %v352, %v479
    %v530 = vadd.f32 %v353, %v482
    %v531 = vadd.f32 %v354, %v487
    %v532 = vadd.f32 %v355, %v490
    %v533 = vadd.f32 %v356, %v495
    %v534 = vadd.f32 %v357, %v498
    %v535 = vadd.f32 %v358, %v503
    %v536 = vadd.f32 %v359, %v506
    %v537 = vadd.f32 %v360, %v511
    %v538 = vadd.f32 %v361, %v514
    %v539 = vadd.f32 %v362, %v519
    %v540 = vadd.f32 %v363, %v522
    %541 = vst.msk [vmem:[#allocation3] sm:$0xff] %vm331, %v525
    %542 = vst.msk [vmem:[#allocation3 + $0x8] sm:$0xff] %vm331, %v526
    %543 = vst.msk [vmem:[#allocation3 + $0x10] sm:$0xff] %vm331, %v527
    %544 = vst.msk [vmem:[#allocation3 + $0x18] sm:$0xff] %vm331, %v528
    %545 = vst.msk [vmem:[#allocation3 + $0x20] sm:$0xff] %vm331, %v529
    %546 = vst.msk [vmem:[#allocation3 + $0x28] sm:$0xff] %vm331, %v530
    %547 = vst.msk [vmem:[#allocation3 + $0x30] sm:$0xff] %vm331, %v531
    %548 = vst.msk [vmem:[#allocation3 + $0x38] sm:$0xff] %vm331, %v532
    %549 = vst.msk [vmem:[#allocation3 + $0x40] sm:$0xff] %vm331, %v533
    %550 = vst.msk [vmem:[#allocation3 + $0x48] sm:$0xff] %vm331, %v534
    %551 = vst.msk [vmem:[#allocation3 + $0x50] sm:$0xff] %vm331, %v535
    %552 = vst.msk [vmem:[#allocation3 + $0x58] sm:$0xff] %vm331, %v536
    %553 = vst.msk [vmem:[#allocation3 + $0x60] sm:$0xff] %vm331, %v537
    %554 = vst.msk [vmem:[#allocation3 + $0x68] sm:$0xff] %vm331, %v538
    %555 = vst.msk [vmem:[#allocation3 + $0x70] sm:$0xff] %vm331, %v539
    %556 = vst.msk [vmem:[#allocation3 + $0x78] sm:$0xff] %vm331, %v540
    // Predicated region
    $region26: #{tpu_custom_call.1} parent=1 // pred_check
      %p557 = pneg %p32
    $region27: #{tpu_custom_call.1} parent=1 // pred_check_branch
      %559 = sbr.rel (%p557) target = $region29
    $region28: #{tpu_custom_call.1} parent=1 // pred_region
      %v560 = vld [vmem:[%s3] sm:$0x1]
      %v561 = vld [vmem:[#allocation2] sm:$0xff]
      %v562 = vld [vmem:[#allocation2 + $0x8] sm:$0xff]
      %v563 = vld [vmem:[#allocation2 + $0x10] sm:$0xff]
      %v564 = vld [vmem:[#allocation2 + $0x18] sm:$0xff]
      %v565 = vld [vmem:[#allocation2 + $0x20] sm:$0xff]
      %v566 = vld [vmem:[#allocation2 + $0x28] sm:$0xff]
      %v567 = vld [vmem:[#allocation2 + $0x30] sm:$0xff]
      %v568 = vld [vmem:[#allocation2 + $0x38] sm:$0xff]
      %v569 = vld [vmem:[#allocation2 + $0x40] sm:$0xff]
      %v570 = vld [vmem:[#allocation2 + $0x48] sm:$0xff]
      %v571 = vld [vmem:[#allocation2 + $0x50] sm:$0xff]
      %v572 = vld [vmem:[#allocation2 + $0x58] sm:$0xff]
      %v573 = vld [vmem:[#allocation2 + $0x60] sm:$0xff]
      %v574 = vld [vmem:[#allocation2 + $0x68] sm:$0xff]
      %v575 = vld [vmem:[#allocation2 + $0x70] sm:$0xff]
      %v576 = vld [vmem:[#allocation2 + $0x78] sm:$0xff]
      %v578 = vlaneseq
      %v579 = vshrl.u32 %v578, 7
      %v580 = vsub.s32 0, %v579
      %v581 = vrot.slane %v560, %v580
      %v583 = vadd.f32 %v561, %v581
      %v584 = vadd.f32 %v562, %v581
      %v585 = vadd.f32 %v563, %v581
      %v586 = vadd.f32 %v564, %v581
      %v587 = vadd.f32 %v565, %v581
      %v588 = vadd.f32 %v566, %v581
      %v589 = vadd.f32 %v567, %v581
      %v590 = vadd.f32 %v568, %v581
      %v591 = vadd.f32 %v569, %v581
      %v592 = vadd.f32 %v570, %v581
      %v593 = vadd.f32 %v571, %v581
      %v594 = vadd.f32 %v572, %v581
      %v595 = vadd.f32 %v573, %v581
      %v596 = vadd.f32 %v574, %v581
      %v597 = vadd.f32 %v575, %v581
      %v598 = vadd.f32 %v576, %v581
      %v599 = vld [vmem:[#allocation3] sm:$0xff]
      %v600 = vld [vmem:[#allocation3 + $0x8] sm:$0xff]
      %v601 = vld [vmem:[#allocation3 + $0x10] sm:$0xff]
      %v602 = vld [vmem:[#allocation3 + $0x18] sm:$0xff]
      %v603 = vld [vmem:[#allocation3 + $0x20] sm:$0xff]
      %v604 = vld [vmem:[#allocation3 + $0x28] sm:$0xff]
      %v605 = vld [vmem:[#allocation3 + $0x30] sm:$0xff]
      %v606 = vld [vmem:[#allocation3 + $0x38] sm:$0xff]
      %v607 = vld [vmem:[#allocation3 + $0x40] sm:$0xff]
      %v608 = vld [vmem:[#allocation3 + $0x48] sm:$0xff]
      %v609 = vld [vmem:[#allocation3 + $0x50] sm:$0xff]
      %v610 = vld [vmem:[#allocation3 + $0x58] sm:$0xff]
      %v611 = vld [vmem:[#allocation3 + $0x60] sm:$0xff]
      %v612 = vld [vmem:[#allocation3 + $0x68] sm:$0xff]
      %v613 = vld [vmem:[#allocation3 + $0x70] sm:$0xff]
      %v614 = vld [vmem:[#allocation3 + $0x78] sm:$0xff]
      %v615 = vadd.f32 %v599, %v581
      %v616 = vadd.f32 %v600, %v581
      %v617 = vadd.f32 %v601, %v581
      %v618 = vadd.f32 %v602, %v581
      %v619 = vadd.f32 %v603, %v581
      %v620 = vadd.f32 %v604, %v581
      %v621 = vadd.f32 %v605, %v581
      %v622 = vadd.f32 %v606, %v581
      %v623 = vadd.f32 %v607, %v581
      %v624 = vadd.f32 %v608, %v581
      %v625 = vadd.f32 %v609, %v581
      %v626 = vadd.f32 %v610, %v581
      %v627 = vadd.f32 %v611, %v581
      %v628 = vadd.f32 %v612, %v581
      %v629 = vadd.f32 %v613, %v581
      %v630 = vadd.f32 %v614, %v581
      %v631 = vlaneseq
      %v632 = vshrl.u32 %v631, 7
      %v633 = vlaneseq
      %v634 = vand.u32 %v633, 127
      %vm635 = vcmp.eq.s32.totalorder %v634, %v632
      %v636 = vsel %vm635, 1, 0
      %v637 = vcvt.s32.f32 %v636
      %v638 = vadd.s32 %v632, 8
      %vm639 = vcmp.eq.s32.totalorder %v634, %v638
      %v640 = vsel %vm639, 1, 0
      %v641 = vcvt.s32.f32 %v640
      %v643 = vsel %vm331, %v615, 0
      %v646 = vsel %vm331, %v616, 0
      %v649 = vsel %vm331, %v617, 0
      %v652 = vsel %vm331, %v618, 0
      %v655 = vsel %vm331, %v619, 0
      %v658 = vsel %vm331, %v620, 0
      %v661 = vsel %vm331, %v621, 0
      %v664 = vsel %vm331, %v622, 0
      %v667 = vsel %vm331, %v623, 0
      %v670 = vsel %vm331, %v624, 0
      %v673 = vsel %vm331, %v625, 0
      %v676 = vsel %vm331, %v626, 0
      %v679 = vsel %vm331, %v627, 0
      %v682 = vsel %vm331, %v628, 0
      %v685 = vsel %vm331, %v629, 0
      %v688 = vsel %vm331, %v630, 0
      %690 = vmatprep.subr.mxu0 0.0
      %691 = vmatpush1.msra.mxu0 %v641
      %692 = vmatprep.subr.mxu0 0.0
      %693 = vmatpush1.msra.mxu0 0.0
      %694 = vmatprep.subr.mxu0 0.0
      %695 = vmatpush1.msra.mxu0 0.0
      %696 = vmatprep.subr.mxu0 0.0
      %697 = vmatpush1.msra.mxu0 0.0
      %698 = vmatprep.subr.mxu0 0.0
      %699 = vmatpush1.msra.mxu0 0.0
      %700 = vmatprep.subr.mxu0 0.0
      %701 = vmatpush1.msra.mxu0 0.0
      %702 = vmatprep.subr.mxu0 0.0
      %703 = vmatpush1.msra.mxu0 0.0
      %704 = vmatprep.subr.mxu0 0.0
      %705 = vmatpush1.msra.mxu0 0.0
      %706 = vmatprep.subr.mxu0 0.0
      %707 = vmatpush1.msra.mxu0 0.0
      %708 = vmatprep.subr.mxu0 0.0
      %709 = vmatpush1.msra.mxu0 0.0
      %710 = vmatprep.subr.mxu0 0.0
      %711 = vmatpush1.msra.mxu0 0.0
      %712 = vmatprep.subr.mxu0 0.0
      %713 = vmatpush1.msra.mxu0 0.0
      %714 = vmatprep.subr.mxu0 0.0
      %715 = vmatpush1.msra.mxu0 0.0
      %716 = vmatprep.subr.mxu0 0.0
      %717 = vmatpush1.msra.mxu0 0.0
      %718 = vmatprep.subr.mxu0 0.0
      %719 = vmatpush1.msra.mxu0 0.0
      %720 = vmatprep.subr.mxu0 0.0
      %721 = vmatpush1.msra.mxu0 0.0
      %722 = vmatprep.subr.mxu0 0.0
      %723 = vmatpush1.msra.mxu0 0.0
      %724 = vmatprep.subr.mxu0 0.0
      %725 = vmatpush1.msra.mxu0 0.0
      %726 = vmatprep.subr.mxu0 0.0
      %727 = vmatpush1.msra.mxu0 0.0
      %728 = vmatprep.subr.mxu0 0.0
      %729 = vmatpush1.msra.mxu0 0.0
      %730 = vmatprep.subr.mxu0 0.0
      %731 = vmatpush1.msra.mxu0 0.0
      %732 = vmatprep.subr.mxu0 0.0
      %733 = vmatpush1.msra.mxu0 0.0
      %734 = vmatprep.subr.mxu0 0.0
      %735 = vmatpush1.msra.mxu0 0.0
      %736 = vmatprep.subr.mxu0 0.0
      %737 = vmatpush1.msra.mxu0 0.0
      %738 = vmatprep.subr.mxu0 0.0
      %739 = vmatpush1.msra.mxu0 0.0
      %740 = vmatprep.subr.mxu0 0.0
      %741 = vmatpush1.msra.mxu0 0.0
      %742 = vmatprep.subr.mxu0 0.0
      %743 = vmatpush1.msra.mxu0 0.0
      %744 = vmatprep.subr.mxu0 0.0
      %745 = vmatpush1.msra.mxu0 0.0
      %746 = vmatprep.subr.mxu0 0.0
      %747 = vmatpush1.msra.mxu0 0.0
      %748 = vmatprep.subr.mxu0 0.0
      %749 = vmatpush1.msra.mxu0 0.0
      %750 = vmatprep.subr.mxu0 0.0
      %751 = vmatpush1.msra.mxu0 0.0
      %752 = vmatprep.subr.mxu0 0.0
      %753 = vmatpush1.msra.mxu0 0.0
      %754 = vmatprep.mubr.f32.mxu0 0.0
      %755 = vmatmul.mubr.f32.gmra.mrb[0].mxu0 %v643
      %v756 = vpop.f32.mrb[0].mxu0
      %v757 = vadd.f32 0.0, %v756
      %v758 = vpop.f32.mrb[0].mxu0
      %759 = vmatprep.mubr.f32.mxu0 0.0
      %760 = vmatmul.mubr.f32.gmra.mrb[0].mxu0 %v646
      %v761 = vpop.f32.mrb[0].mxu0
      %v762 = vadd.f32 0.0, %v761
      %v763 = vpop.f32.mrb[0].mxu0
      %764 = vmatprep.mubr.f32.mxu0 0.0
      %765 = vmatmul.mubr.f32.gmra.mrb[0].mxu0 %v649
      %v766 = vpop.f32.mrb[0].mxu0
      %v767 = vadd.f32 0.0, %v766
      %v768 = vpop.f32.mrb[0].mxu0
      %769 = vmatprep.mubr.f32.mxu0 0.0
      %770 = vmatmul.mubr.f32.gmra.mrb[0].mxu0 %v652
      %v771 = vpop.f32.mrb[0].mxu0
      %v772 = vadd.f32 0.0, %v771
      %v773 = vpop.f32.mrb[0].mxu0
      %774 = vmatprep.mubr.f32.mxu0 0.0
      %775 = vmatmul.mubr.f32.gmra.mrb[0].mxu0 %v655
      %v776 = vpop.f32.mrb[0].mxu0
      %v777 = vadd.f32 0.0, %v776
      %v778 = vpop.f32.mrb[0].mxu0
      %779 = vmatprep.mubr.f32.mxu0 0.0
      %780 = vmatmul.mubr.f32.gmra.mrb[0].mxu0 %v658
      %v781 = vpop.f32.mrb[0].mxu0
      %v782 = vadd.f32 0.0, %v781
      %v783 = vpop.f32.mrb[0].mxu0
      %784 = vmatprep.mubr.f32.mxu0 0.0
      %785 = vmatmul.mubr.f32.gmra.mrb[0].mxu0 %v661
      %v786 = vpop.f32.mrb[0].mxu0
      %v787 = vadd.f32 0.0, %v786
      %v788 = vpop.f32.mrb[0].mxu0
      %789 = vmatprep.mubr.f32.mxu0 0.0
      %790 = vmatmul.mubr.f32.gmra.mrb[0].mxu0 %v664
      %v791 = vpop.f32.mrb[0].mxu0
      %v792 = vadd.f32 0.0, %v791
      %v793 = vpop.f32.mrb[0].mxu0
      %794 = vmatprep.mubr.f32.mxu0 0.0
      %795 = vmatmul.mubr.f32.gmra.mrb[0].mxu0 %v667
      %v796 = vpop.f32.mrb[0].mxu0
      %v797 = vadd.f32 0.0, %v796
      %v798 = vpop.f32.mrb[0].mxu0
      %799 = vmatprep.mubr.f32.mxu0 0.0
      %800 = vmatmul.mubr.f32.gmra.mrb[0].mxu0 %v670
      %v801 = vpop.f32.mrb[0].mxu0
      %v802 = vadd.f32 0.0, %v801
      %v803 = vpop.f32.mrb[0].mxu0
      %804 = vmatprep.mubr.f32.mxu0 0.0
      %805 = vmatmul.mubr.f32.gmra.mrb[0].mxu0 %v673
      %v806 = vpop.f32.mrb[0].mxu0
      %v807 = vadd.f32 0.0, %v806
      %v808 = vpop.f32.mrb[0].mxu0
      %809 = vmatprep.mubr.f32.mxu0 0.0
      %810 = vmatmul.mubr.f32.gmra.mrb[0].mxu0 %v676
      %v811 = vpop.f32.mrb[0].mxu0
      %v812 = vadd.f32 0.0, %v811
      %v813 = vpop.f32.mrb[0].mxu0
      %814 = vmatprep.mubr.f32.mxu0 0.0
      %815 = vmatmul.mubr.f32.gmra.mrb[0].mxu0 %v679
      %v816 = vpop.f32.mrb[0].mxu0
      %v817 = vadd.f32 0.0, %v816
      %v818 = vpop.f32.mrb[0].mxu0
      %819 = vmatprep.mubr.f32.mxu0 0.0
      %820 = vmatmul.mubr.f32.gmra.mrb[0].mxu0 %v682
      %v821 = vpop.f32.mrb[0].mxu0
      %v822 = vadd.f32 0.0, %v821
      %v823 = vpop.f32.mrb[0].mxu0
      %824 = vmatprep.mubr.f32.mxu0 0.0
      %825 = vmatmul.mubr.f32.gmra.mrb[0].mxu0 %v685
      %v826 = vpop.f32.mrb[0].mxu0
      %v827 = vadd.f32 0.0, %v826
      %v828 = vpop.f32.mrb[0].mxu0
      %829 = vmatprep.mubr.f32.mxu0 0.0
      %830 = vmatmul.mubr.f32.gmra.mrb[0].mxu0 %v688
      %v831 = vpop.f32.mrb[0].mxu0
      %v832 = vadd.f32 0.0, %v831
      %v833 = vpop.f32.mrb[0].mxu0
      %834 = vdwg.mxu0
      %v836 = vsel %vm331, %v583, 0
      %v839 = vsel %vm331, %v584, 0
      %v842 = vsel %vm331, %v585, 0
      %v845 = vsel %vm331, %v586, 0
      %v848 = vsel %vm331, %v587, 0
      %v851 = vsel %vm331, %v588, 0
      %v854 = vsel %vm331, %v589, 0
      %v857 = vsel %vm331, %v590, 0
      %v860 = vsel %vm331, %v591, 0
      %v863 = vsel %vm331, %v592, 0
      %v866 = vsel %vm331, %v593, 0
      %v869 = vsel %vm331, %v594, 0
      %v872 = vsel %vm331, %v595, 0
      %v875 = vsel %vm331, %v596, 0
      %v878 = vsel %vm331, %v597, 0
      %v881 = vsel %vm331, %v598, 0
      %883 = vmatprep.subr.mxu0 0.0
      %884 = vmatpush1.msra.mxu0 %v637
      %885 = vmatprep.subr.mxu0 0.0
      %886 = vmatpush1.msra.mxu0 0.0
      %887 = vmatprep.subr.mxu0 0.0
      %888 = vmatpush1.msra.mxu0 0.0
      %889 = vmatprep.subr.mxu0 0.0
      %890 = vmatpush1.msra.mxu0 0.0
      %891 = vmatprep.subr.mxu0 0.0
      %892 = vmatpush1.msra.mxu0 0.0
      %893 = vmatprep.subr.mxu0 0.0
      %894 = vmatpush1.msra.mxu0 0.0
      %895 = vmatprep.subr.mxu0 0.0
      %896 = vmatpush1.msra.mxu0 0.0
      %897 = vmatprep.subr.mxu0 0.0
      %898 = vmatpush1.msra.mxu0 0.0
      %899 = vmatprep.subr.mxu0 0.0
      %900 = vmatpush1.msra.mxu0 0.0
      %901 = vmatprep.subr.mxu0 0.0
      %902 = vmatpush1.msra.mxu0 0.0
      %903 = vmatprep.subr.mxu0 0.0
      %904 = vmatpush1.msra.mxu0 0.0
      %905 = vmatprep.subr.mxu0 0.0
      %906 = vmatpush1.msra.mxu0 0.0
      %907 = vmatprep.subr.mxu0 0.0
      %908 = vmatpush1.msra.mxu0 0.0
      %909 = vmatprep.subr.mxu0 0.0
      %910 = vmatpush1.msra.mxu0 0.0
      %911 = vmatprep.subr.mxu0 0.0
      %912 = vmatpush1.msra.mxu0 0.0
      %913 = vmatprep.subr.mxu0 0.0
      %914 = vmatpush1.msra.mxu0 0.0
      %915 = vmatprep.subr.mxu0 0.0
      %916 = vmatpush1.msra.mxu0 0.0
      %917 = vmatprep.subr.mxu0 0.0
      %918 = vmatpush1.msra.mxu0 0.0
      %919 = vmatprep.subr.mxu0 0.0
      %920 = vmatpush1.msra.mxu0 0.0
      %921 = vmatprep.subr.mxu0 0.0
      %922 = vmatpush1.msra.mxu0 0.0
      %923 = vmatprep.subr.mxu0 0.0
      %924 = vmatpush1.msra.mxu0 0.0
      %925 = vmatprep.subr.mxu0 0.0
      %926 = vmatpush1.msra.mxu0 0.0
      %927 = vmatprep.subr.mxu0 0.0
      %928 = vmatpush1.msra.mxu0 0.0
      %929 = vmatprep.subr.mxu0 0.0
      %930 = vmatpush1.msra.mxu0 0.0
      %931 = vmatprep.subr.mxu0 0.0
      %932 = vmatpush1.msra.mxu0 0.0
      %933 = vmatprep.subr.mxu0 0.0
      %934 = vmatpush1.msra.mxu0 0.0
      %935 = vmatprep.subr.mxu0 0.0
      %936 = vmatpush1.msra.mxu0 0.0
      %937 = vmatprep.subr.mxu0 0.0
      %938 = vmatpush1.msra.mxu0 0.0
      %939 = vmatprep.subr.mxu0 0.0
      %940 = vmatpush1.msra.mxu0 0.0
      %941 = vmatprep.subr.mxu0 0.0
      %942 = vmatpush1.msra.mxu0 0.0
      %943 = vmatprep.subr.mxu0 0.0
      %944 = vmatpush1.msra.mxu0 0.0
      %945 = vmatprep.subr.mxu0 0.0
      %946 = vmatpush1.msra.mxu0 0.0
      %947 = vmatprep.mubr.f32.mxu0 0.0
      %948 = vmatmul.mubr.f32.gmra.mrb[0].mxu0 %v836
      %v949 = vpop.f32.mrb[0].mxu0
      %v950 = vadd.f32 %v757, %v949
      %v951 = vpop.f32.mrb[0].mxu0
      %952 = vmatprep.mubr.f32.mxu0 0.0
      %953 = vmatmul.mubr.f32.gmra.mrb[0].mxu0 %v839
      %v954 = vpop.f32.mrb[0].mxu0
      %v955 = vadd.f32 %v762, %v954
      %v956 = vpop.f32.mrb[0].mxu0
      %957 = vmatprep.mubr.f32.mxu0 0.0
      %958 = vmatmul.mubr.f32.gmra.mrb[0].mxu0 %v842
      %v959 = vpop.f32.mrb[0].mxu0
      %v960 = vadd.f32 %v767, %v959
      %v961 = vpop.f32.mrb[0].mxu0
      %962 = vmatprep.mubr.f32.mxu0 0.0
      %963 = vmatmul.mubr.f32.gmra.mrb[0].mxu0 %v845
      %v964 = vpop.f32.mrb[0].mxu0
      %v965 = vadd.f32 %v772, %v964
      %v966 = vpop.f32.mrb[0].mxu0
      %967 = vmatprep.mubr.f32.mxu0 0.0
      %968 = vmatmul.mubr.f32.gmra.mrb[0].mxu0 %v848
      %v969 = vpop.f32.mrb[0].mxu0
      %v970 = vadd.f32 %v777, %v969
      %v971 = vpop.f32.mrb[0].mxu0
      %972 = vmatprep.mubr.f32.mxu0 0.0
      %973 = vmatmul.mubr.f32.gmra.mrb[0].mxu0 %v851
      %v974 = vpop.f32.mrb[0].mxu0
      %v975 = vadd.f32 %v782, %v974
      %v976 = vpop.f32.mrb[0].mxu0
      %977 = vmatprep.mubr.f32.mxu0 0.0
      %978 = vmatmul.mubr.f32.gmra.mrb[0].mxu0 %v854
      %v979 = vpop.f32.mrb[0].mxu0
      %v980 = vadd.f32 %v787, %v979
      %v981 = vpop.f32.mrb[0].mxu0
      %982 = vmatprep.mubr.f32.mxu0 0.0
      %983 = vmatmul.mubr.f32.gmra.mrb[0].mxu0 %v857
      %v984 = vpop.f32.mrb[0].mxu0
      %v985 = vadd.f32 %v792, %v984
      %v986 = vpop.f32.mrb[0].mxu0
      %987 = vmatprep.mubr.f32.mxu0 0.0
      %988 = vmatmul.mubr.f32.gmra.mrb[0].mxu0 %v860
      %v989 = vpop.f32.mrb[0].mxu0
      %v990 = vadd.f32 %v797, %v989
      %v991 = vpop.f32.mrb[0].mxu0
      %992 = vmatprep.mubr.f32.mxu0 0.0
      %993 = vmatmul.mubr.f32.gmra.mrb[0].mxu0 %v863
      %v994 = vpop.f32.mrb[0].mxu0
      %v995 = vadd.f32 %v802, %v994
      %v996 = vpop.f32.mrb[0].mxu0
      %997 = vmatprep.mubr.f32.mxu0 0.0
      %998 = vmatmul.mubr.f32.gmra.mrb[0].mxu0 %v866
      %v999 = vpop.f32.mrb[0].mxu0
      %v1000 = vadd.f32 %v807, %v999
      %v1001 = vpop.f32.mrb[0].mxu0
      %1002 = vmatprep.mubr.f32.mxu0 0.0
      %1003 = vmatmul.mubr.f32.gmra.mrb[0].mxu0 %v869
      %v1004 = vpop.f32.mrb[0].mxu0
      %v1005 = vadd.f32 %v812, %v1004
      %v1006 = vpop.f32.mrb[0].mxu0
      %1007 = vmatprep.mubr.f32.mxu0 0.0
      %1008 = vmatmul.mubr.f32.gmra.mrb[0].mxu0 %v872
      %v1009 = vpop.f32.mrb[0].mxu0
      %v1010 = vadd.f32 %v817, %v1009
      %v1011 = vpop.f32.mrb[0].mxu0
      %1012 = vmatprep.mubr.f32.mxu0 0.0
      %1013 = vmatmul.mubr.f32.gmra.mrb[0].mxu0 %v875
      %v1014 = vpop.f32.mrb[0].mxu0
      %v1015 = vadd.f32 %v822, %v1014
      %v1016 = vpop.f32.mrb[0].mxu0
      %1017 = vmatprep.mubr.f32.mxu0 0.0
      %1018 = vmatmul.mubr.f32.gmra.mrb[0].mxu0 %v878
      %v1019 = vpop.f32.mrb[0].mxu0
      %v1020 = vadd.f32 %v827, %v1019
      %v1021 = vpop.f32.mrb[0].mxu0
      %1022 = vmatprep.mubr.f32.mxu0 0.0
      %1023 = vmatmul.mubr.f32.gmra.mrb[0].mxu0 %v881
      %v1024 = vpop.f32.mrb[0].mxu0
      %v1025 = vadd.f32 %v832, %v1024
      %v1026 = vpop.f32.mrb[0].mxu0
      %1027 = vdwg.mxu0
      %vm1028 = vcmask 130048
      %1029 = vst.msk [vmem:[%s4] sm:$0xff] %vm1028, %v950
      %1030 = vst.msk [vmem:[%s4 + $0x8] sm:$0xff] %vm1028, %v955
      %1031 = vst.msk [vmem:[%s4 + $0x10] sm:$0xff] %vm1028, %v960
      %1032 = vst.msk [vmem:[%s4 + $0x18] sm:$0xff] %vm1028, %v965
      %1033 = vst.msk [vmem:[%s4 + $0x20] sm:$0xff] %vm1028, %v970
      %1034 = vst.msk [vmem:[%s4 + $0x28] sm:$0xff] %vm1028, %v975
      %1035 = vst.msk [vmem:[%s4 + $0x30] sm:$0xff] %vm1028, %v980
      %1036 = vst.msk [vmem:[%s4 + $0x38] sm:$0xff] %vm1028, %v985
      %1037 = vst.msk [vmem:[%s4 + $0x40] sm:$0xff] %vm1028, %v990
      %1038 = vst.msk [vmem:[%s4 + $0x48] sm:$0xff] %vm1028, %v995
      %1039 = vst.msk [vmem:[%s4 + $0x50] sm:$0xff] %vm1028, %v1000
      %1040 = vst.msk [vmem:[%s4 + $0x58] sm:$0xff] %vm1028, %v1005
      %1041 = vst.msk [vmem:[%s4 + $0x60] sm:$0xff] %vm1028, %v1010
      %1042 = vst.msk [vmem:[%s4 + $0x68] sm:$0xff] %vm1028, %v1015
      %1043 = vst.msk [vmem:[%s4 + $0x70] sm:$0xff] %vm1028, %v1020
      %1044 = vst.msk [vmem:[%s4 + $0x78] sm:$0xff] %vm1028, %v1025
    $region29: #{tpu_custom_call.1} parent=1 // pred_fallthru
      _
    // Predicated region
    $region30: #{tpu_custom_call.1} parent=1 // pred_check
      _
    $region31: #{tpu_custom_call.1} parent=1 // pred_check_branch
      %1046 = sbr.rel (0) target = $region33
    $region32: #{tpu_custom_call.1} parent=1 // pred_region
      _
    $region33: #{tpu_custom_call.1} parent=1 // pred_fallthru
      _
    // Predicated region
    $region34: #{tpu_custom_call.1} parent=1 // pred_check
      _
    $region35: #{tpu_custom_call.1} parent=1 // pred_check_branch
      %1048 = sbr.rel (0) target = $region37
    $region36: #{tpu_custom_call.1} parent=1 // pred_region
      _
    $region37: #{tpu_custom_call.1} parent=1 // pred_fallthru
      _
    %1049 = vsyncpa [#allocation5], 1

</llo_original>
